<compile_context>
chip_gen: v5e
topology: v5e:2x2
jax: 0.10.0
libtpu: 0.0.40
codegen_flags: <defaults>
</compile_context>

<pallas_src>
import jax
import jax.numpy as jnp
from jax.experimental import pallas as pl
from jax.experimental.pallas import tpu as pltpu


def _round_up(x: int, m: int) -> int:
    return ((x + m - 1) // m) * m


def _make_ffn_kernel(has_mask: bool, eps: float):
    def kernel(*refs):
        if has_mask:
            (x_ref, mask_ref, w1_ref, b1_ref, w2_ref, b2_ref,
             g_ref, beta_ref, o_ref) = refs
        else:
            (x_ref, w1_ref, b1_ref, w2_ref, b2_ref,
             g_ref, beta_ref, o_ref) = refs
            mask_ref = None

        x = x_ref[...].astype(jnp.float32)                       # (tm, d)

        # h = relu(x @ W1 + b1)
        h = jnp.dot(x, w1_ref[...].astype(jnp.float32),
                    preferred_element_type=jnp.float32,
                    precision=jax.lax.Precision.HIGHEST)          # (tm, dff)
        h = jnp.maximum(h + b1_ref[...].astype(jnp.float32), 0.0)

        # inverted dropout (mask already contains keep/(1-p))
        if mask_ref is not None:
            h = h * mask_ref[...].astype(jnp.float32)

        # o = h @ W2 + b2
        o = jnp.dot(h, w2_ref[...].astype(jnp.float32),
                    preferred_element_type=jnp.float32,
                    precision=jax.lax.Precision.HIGHEST)          # (tm, d)
        o = o + b2_ref[...].astype(jnp.float32)

        # ResandNorm: LayerNorm(o + x)
        z = o + x
        mu = jnp.mean(z, axis=-1, keepdims=True)
        zc = z - mu
        var = jnp.mean(zc * zc, axis=-1, keepdims=True)
        inv = jax.lax.rsqrt(var + eps)
        y = zc * inv * g_ref[...].astype(jnp.float32) + beta_ref[...].astype(jnp.float32)

        o_ref[...] = y.astype(o_ref.dtype)

    return kernel


def feedforward(x, w1, b1, w2, b2, gamma, beta, *,
                dropout_mask=None, eps: float = 1e-5,
                block_rows: int | None = None):
    """Pallas implementation of Feedforward.forward(input).

    x:            (..., modeldim)
    w1:           (modeldim, dff)   == torch w1.weight.T
    b1:           (dff,)
    w2:           (dff, modeldim)   == torch w2.weight.T
    b2:           (modeldim,)
    gamma, beta:  (modeldim,)       layernorm affine params
    dropout_mask: optional (..., dff) multiplicative mask (keep/(1-p)); None = eval mode.
    """
    orig_shape = x.shape
    d = orig_shape[-1]
    dff = w1.shape[1]
    assert w1.shape == (d, dff) and w2.shape == (dff, d)

    x2 = x.reshape(-1, d)
    n = x2.shape[0]

    if block_rows is None:
        # VMEM-budgeted default (v7x-safe), multiple of 8 (f32 sublane).
        block_rows = min(512, _round_up(n, 8))
    block_rows = max(8, (block_rows // 8) * 8)

    n_pad = _round_up(n, block_rows)
    if n_pad != n:
        x2 = jnp.pad(x2, ((0, n_pad - n), (0, 0)))

    has_mask = dropout_mask is not None
    if has_mask:
        m2 = dropout_mask.reshape(-1, dff).astype(jnp.float32)
        if n_pad != n:
            m2 = jnp.pad(m2, ((0, n_pad - n), (0, 0)))

    b1_2d = b1.reshape(1, dff)
    b2_2d = b2.reshape(1, d)
    g_2d = gamma.reshape(1, d)
    bt_2d = beta.reshape(1, d)

    grid = (n_pad // block_rows,)

    row_spec = pl.BlockSpec((block_rows, d), lambda i: (i, 0))
    in_specs = [row_spec]
    args = [x2]
    if has_mask:
        in_specs.append(pl.BlockSpec((block_rows, dff), lambda i: (i, 0)))
        args.append(m2)
    in_specs += [
        pl.BlockSpec((d, dff), lambda i: (0, 0)),    # w1 (full, reused every step)
        pl.BlockSpec((1, dff), lambda i: (0, 0)),    # b1
        pl.BlockSpec((dff, d), lambda i: (0, 0)),    # w2
        pl.BlockSpec((1, d), lambda i: (0, 0)),      # b2
        pl.BlockSpec((1, d), lambda i: (0, 0)),      # gamma
        pl.BlockSpec((1, d), lambda i: (0, 0)),      # beta
    ]
    args += [w1, b1_2d, w2, b2_2d, g_2d, bt_2d]

    out = pl.pallas_call(
        _make_ffn_kernel(has_mask, eps),
        out_shape=jax.ShapeDtypeStruct((n_pad, d), x.dtype),
        grid=grid,
        in_specs=in_specs,
        out_specs=pl.BlockSpec((block_rows, d), lambda i: (i, 0)),
        compiler_params=pltpu.CompilerParams(
            dimension_semantics=("parallel",)),      # row tiles are independent
    )(*args)

    return out[:n].reshape(orig_shape)


def _reference(x, w1, b1, w2, b2, gamma, beta, mask=None, eps=1e-5):
    """Pure-JAX reference of Feedforward.forward (same mask for exact check)."""
    h = jnp.maximum(jnp.dot(x, w1, precision=jax.lax.Precision.HIGHEST) + b1, 0.0)
    if mask is not None:
        h = h * mask
    o = jnp.dot(h, w2, precision=jax.lax.Precision.HIGHEST) + b2
    z = o + x
    mu = z.mean(-1, keepdims=True)
    var = ((z - mu) ** 2).mean(-1, keepdims=True)
    return (z - mu) * jax.lax.rsqrt(var + eps) * gamma + beta


if __name__ == "__main__":
    batch, seq, modeldim, dff = 2, 8, 32, 64
    p = 0.3

    keys = jax.random.split(jax.random.PRNGKey(0), 6)
    x = jax.random.normal(keys[0], (batch, seq, modeldim), jnp.float32)
    # nn.Linear-style uniform init (exact distribution irrelevant for the check).
    w1 = jax.random.uniform(keys[1], (modeldim, dff), jnp.float32, -1.0, 1.0) / jnp.sqrt(modeldim)
    b1 = jax.random.uniform(keys[2], (dff,), jnp.float32, -1.0, 1.0) / jnp.sqrt(modeldim)
    w2 = jax.random.uniform(keys[3], (dff, modeldim), jnp.float32, -1.0, 1.0) / jnp.sqrt(dff)
    b2 = jax.random.uniform(keys[4], (modeldim,), jnp.float32, -1.0, 1.0) / jnp.sqrt(dff)
    gamma = jnp.ones((modeldim,), jnp.float32)
    beta = jnp.zeros((modeldim,), jnp.float32)

    # Eval mode (dropout == identity).
    out_eval = jax.block_until_ready(feedforward(x, w1, b1, w2, b2, gamma, beta))
    ref_eval = _reference(x, w1, b1, w2, b2, gamma, beta)
    assert out_eval.shape == x.shape
    assert jnp.allclose(out_eval, ref_eval, atol=1e-4, rtol=1e-4), "eval mismatch"

    # Training mode: host-generated inverted-dropout mask, applied in-kernel.
    keep = jax.random.bernoulli(keys[5], 1.0 - p, (batch, seq, dff))
    mask = keep.astype(jnp.float32) / (1.0 - p)
    out_train = jax.block_until_ready(
        feedforward(x, w1, b1, w2, b2, gamma, beta, dropout_mask=mask))
    ref_train = _reference(x, w1, b1, w2, b2, gamma, beta, mask=mask)
    assert out_train.shape == x.shape
    assert jnp.allclose(out_train, ref_train, atol=1e-4, rtol=1e-4), "train mismatch"

    print("KERNEL_OK")
</pallas_src>

<mosaic_0001>
module attributes {stable_mosaic.version = 11 : i64} {
  func.func @kernel(%arg0: i32, %arg1: memref<16x32xf32, #tpu.memory_space<vmem>>, %arg2: memref<32x64xf32, #tpu.memory_space<vmem>>, %arg3: memref<1x64xf32, #tpu.memory_space<vmem>>, %arg4: memref<64x32xf32, #tpu.memory_space<vmem>>, %arg5: memref<1x32xf32, #tpu.memory_space<vmem>>, %arg6: memref<1x32xf32, #tpu.memory_space<vmem>>, %arg7: memref<1x32xf32, #tpu.memory_space<vmem>>, %arg8: memref<16x32xf32, #tpu.memory_space<vmem>>) attributes {dimension_semantics = [#tpu.dimension_semantics<parallel>], iteration_bounds = array<i64: 1>, scalar_prefetch = 0 : i64, scratch_operands = 0 : i64, tpu.core_type = #tpu.core_type<tc>, window_params = [{transform_indices = @transform_0, window_bounds = array<i64: 16, 32>}, {pipeline_mode = #tpu.pipeline_mode<synchronous>, transform_indices = @transform_1, window_bounds = array<i64: 32, 64>}, {pipeline_mode = #tpu.pipeline_mode<synchronous>, transform_indices = @transform_2, window_bounds = array<i64: 1, 64>}, {pipeline_mode = #tpu.pipeline_mode<synchronous>, transform_indices = @transform_3, window_bounds = array<i64: 64, 32>}, {pipeline_mode = #tpu.pipeline_mode<synchronous>, transform_indices = @transform_4, window_bounds = array<i64: 1, 32>}, {pipeline_mode = #tpu.pipeline_mode<synchronous>, transform_indices = @transform_5, window_bounds = array<i64: 1, 32>}, {pipeline_mode = #tpu.pipeline_mode<synchronous>, transform_indices = @transform_6, window_bounds = array<i64: 1, 32>}, {transform_indices = @transform_7, window_bounds = array<i64: 16, 32>}]} {
    %c0 = arith.constant 0 : index
    %c0_0 = arith.constant 0 : index
    %0 = vector.load %arg1[%c0, %c0_0] : memref<16x32xf32, #tpu.memory_space<vmem>>, vector<16x32xf32>
    %c0_1 = arith.constant 0 : index
    %c0_2 = arith.constant 0 : index
    %1 = vector.load %arg2[%c0_1, %c0_2] : memref<32x64xf32, #tpu.memory_space<vmem>>, vector<32x64xf32>
    %cst = arith.constant dense<0.000000e+00> : vector<16x64xf32>
    %2 = tpu.matmul %0, %1, %cst {dimension_numbers = #tpu.dot_dimension_numbers<[1], [0], [0], [1], [0, 0, 1, 1], [], []>, precision = #tpu.contract_precision<fp32>} : vector<16x32xf32>, vector<32x64xf32>, vector<16x64xf32> -> vector<16x64xf32>
    %c0_3 = arith.constant 0 : index
    %c0_4 = arith.constant 0 : index
    %3 = vector.load %arg3[%c0_3, %c0_4] : memref<1x64xf32, #tpu.memory_space<vmem>>, vector<1x64xf32>
    %4 = vector.broadcast %3 : vector<1x64xf32> to vector<16x64xf32>
    %5 = arith.addf %2, %4 : vector<16x64xf32>
    %cst_5 = arith.constant 0.000000e+00 : f32
    %6 = vector.broadcast %cst_5 : f32 to vector<16x64xf32>
    %7 = arith.maximumf %5, %6 : vector<16x64xf32>
    %c0_6 = arith.constant 0 : index
    %c0_7 = arith.constant 0 : index
    %8 = vector.load %arg4[%c0_6, %c0_7] : memref<64x32xf32, #tpu.memory_space<vmem>>, vector<64x32xf32>
    %cst_8 = arith.constant dense<0.000000e+00> : vector<16x32xf32>
    %9 = tpu.matmul %7, %8, %cst_8 {dimension_numbers = #tpu.dot_dimension_numbers<[1], [0], [0], [1], [0, 0, 1, 1], [], []>, precision = #tpu.contract_precision<fp32>} : vector<16x64xf32>, vector<64x32xf32>, vector<16x32xf32> -> vector<16x32xf32>
    %c0_9 = arith.constant 0 : index
    %c0_10 = arith.constant 0 : index
    %10 = vector.load %arg5[%c0_9, %c0_10] : memref<1x32xf32, #tpu.memory_space<vmem>>, vector<1x32xf32>
    %11 = vector.broadcast %10 : vector<1x32xf32> to vector<16x32xf32>
    %12 = arith.addf %9, %11 : vector<16x32xf32>
    %13 = arith.addf %12, %0 : vector<16x32xf32>
    %cst_11 = arith.constant dense<0.000000e+00> : vector<16xf32>
    %14 = vector.multi_reduction <add>, %13, %cst_11 [1] : vector<16x32xf32> to vector<16xf32>
    %15 = vector.shape_cast %14 : vector<16xf32> to vector<16x1xf32>
    %cst_12 = arith.constant 3.200000e+01 : f32
    %16 = vector.broadcast %cst_12 : f32 to vector<16x1xf32>
    %17 = arith.divf %15, %16 : vector<16x1xf32>
    %18 = vector.broadcast %17 : vector<16x1xf32> to vector<16x32xf32>
    %19 = arith.subf %13, %18 : vector<16x32xf32>
    %20 = arith.mulf %19, %19 : vector<16x32xf32>
    %cst_13 = arith.constant dense<0.000000e+00> : vector<16xf32>
    %21 = vector.multi_reduction <add>, %20, %cst_13 [1] : vector<16x32xf32> to vector<16xf32>
    %22 = vector.shape_cast %21 : vector<16xf32> to vector<16x1xf32>
    %cst_14 = arith.constant 3.200000e+01 : f32
    %23 = vector.broadcast %cst_14 : f32 to vector<16x1xf32>
    %24 = arith.divf %22, %23 : vector<16x1xf32>
    %cst_15 = arith.constant 9.99999974E-6 : f32
    %25 = vector.broadcast %cst_15 : f32 to vector<16x1xf32>
    %26 = arith.addf %24, %25 : vector<16x1xf32>
    %27 = math.rsqrt %26 : vector<16x1xf32>
    %28 = vector.broadcast %27 : vector<16x1xf32> to vector<16x32xf32>
    %29 = arith.mulf %19, %28 : vector<16x32xf32>
    %c0_16 = arith.constant 0 : index
    %c0_17 = arith.constant 0 : index
    %30 = vector.load %arg6[%c0_16, %c0_17] : memref<1x32xf32, #tpu.memory_space<vmem>>, vector<1x32xf32>
    %31 = vector.broadcast %30 : vector<1x32xf32> to vector<16x32xf32>
    %32 = arith.mulf %29, %31 : vector<16x32xf32>
    %c0_18 = arith.constant 0 : index
    %c0_19 = arith.constant 0 : index
    %33 = vector.load %arg7[%c0_18, %c0_19] : memref<1x32xf32, #tpu.memory_space<vmem>>, vector<1x32xf32>
    %34 = vector.broadcast %33 : vector<1x32xf32> to vector<16x32xf32>
    %35 = arith.addf %32, %34 : vector<16x32xf32>
    %c0_20 = arith.constant 0 : index
    %c0_21 = arith.constant 0 : index
    %36 = vector.load %arg8[%c0_20, %c0_21] : memref<16x32xf32, #tpu.memory_space<vmem>>, vector<16x32xf32>
    tpu.vector_store %arg8[%c0_20, %c0_21], %35 {strides = array<i32>} : memref<16x32xf32, #tpu.memory_space<vmem>>, vector<16x32xf32>,
    return
  }
  func.func @transform_0(%arg0: i32) -> (i32, i32) {
    %c0_i32 = arith.constant 0 : i32
    %c0_i32_0 = arith.constant 0 : i32
    return %arg0, %c0_i32 : i32, i32
  }
  func.func @transform_1(%arg0: i32) -> (i32, i32) {
    %c0_i32 = arith.constant 0 : i32
    %c0_i32_0 = arith.constant 0 : i32
    %c0_i32_1 = arith.constant 0 : i32
    return %c0_i32, %c0_i32_0 : i32, i32
  }
  func.func @transform_2(%arg0: i32) -> (i32, i32) {
    %c0_i32 = arith.constant 0 : i32
    %c0_i32_0 = arith.constant 0 : i32
    %c0_i32_1 = arith.constant 0 : i32
    return %c0_i32, %c0_i32_0 : i32, i32
  }
  func.func @transform_3(%arg0: i32) -> (i32, i32) {
    %c0_i32 = arith.constant 0 : i32
    %c0_i32_0 = arith.constant 0 : i32
    %c0_i32_1 = arith.constant 0 : i32
    return %c0_i32, %c0_i32_0 : i32, i32
  }
  func.func @transform_4(%arg0: i32) -> (i32, i32) {
    %c0_i32 = arith.constant 0 : i32
    %c0_i32_0 = arith.constant 0 : i32
    %c0_i32_1 = arith.constant 0 : i32
    return %c0_i32, %c0_i32_0 : i32, i32
  }
  func.func @transform_5(%arg0: i32) -> (i32, i32) {
    %c0_i32 = arith.constant 0 : i32
    %c0_i32_0 = arith.constant 0 : i32
    %c0_i32_1 = arith.constant 0 : i32
    return %c0_i32, %c0_i32_0 : i32, i32
  }
  func.func @transform_6(%arg0: i32) -> (i32, i32) {
    %c0_i32 = arith.constant 0 : i32
    %c0_i32_0 = arith.constant 0 : i32
    %c0_i32_1 = arith.constant 0 : i32
    return %c0_i32, %c0_i32_0 : i32, i32
  }
  func.func @transform_7(%arg0: i32) -> (i32, i32) {
    %c0_i32 = arith.constant 0 : i32
    %c0_i32_0 = arith.constant 0 : i32
    return %arg0, %c0_i32 : i32, i32
  }
}

</mosaic_0001>

<llo_original>
// kernel: tpu_custom_call.1
$region0: #{tpu_custom_call.1}
  #allocation0 [shape = 'u32[]', space=smem, size = 0x4, offset = 0x4, fixed_abs, tag = 'smem constant byte address 0x4 - core index']
  #allocation1 [shape = 'u32[72,128]{1,0:T(1,128)}', space=vmem, size = 0x9000, scoped, tag = 'internal scratch']
  %s0 = inlined_call_operand.vmem [shape: f32[16,32], index: 0, kind: input, shape index: {}]
  %s1 = inlined_call_operand.vmem [shape: f32[32,64], index: 1, kind: input, shape index: {}]
  %s2 = inlined_call_operand.vmem [shape: f32[1,64], index: 2, kind: input, shape index: {}]
  %s3 = inlined_call_operand.vmem [shape: f32[64,32], index: 3, kind: input, shape index: {}]
  %s4 = inlined_call_operand.vmem [shape: f32[1,32], index: 4, kind: input, shape index: {}]
  %s5 = inlined_call_operand.vmem [shape: f32[1,32], index: 5, kind: input, shape index: {}]
  %s6 = inlined_call_operand.vmem [shape: f32[1,32], index: 6, kind: input, shape index: {}]
  %s7 = inlined_call_operand.hbm [shape: f32[16,32], index: 7, kind: output, shape index: {}]
  %s8 = sld [smem:[#allocation0]]
  $region38: #{tpu_custom_call.1} parent=0
    _
  %s10 = ssub.s32 1, %s8
  %s11 = scalar_select 0, %s10, %s8
  $region1: #{tpu_custom_call.1} parent=0
    #allocation2 [shape = 'u8[8192]{0}', space=vmem, size = 0x2000, scoped, tag = 'output window, operand 0, single buffered']
    #allocation3 [shape = 's32[1]{0}', space=sflag, size = 0x4, scoped, tag = 'scoped memory for tpu_custom_call.1']
    %12 = vsyncpa [#allocation3], 0
    // Predicated region
    $region2: #{tpu_custom_call.1} parent=1 // pred_check
      _
    $region3: #{tpu_custom_call.1} parent=1 // pred_check_branch
      %14 = sbr.rel (0) target = $region5
    $region4: #{tpu_custom_call.1} parent=1 // pred_region
      _
    $region5: #{tpu_custom_call.1} parent=1 // pred_fallthru
      _
    // Predicated region
    $region6: #{tpu_custom_call.1} parent=1 // pred_check
      _
    $region7: #{tpu_custom_call.1} parent=1 // pred_check_branch
      %16 = sbr.rel (0) target = $region9
    $region8: #{tpu_custom_call.1} parent=1 // pred_region
      _
    $region9: #{tpu_custom_call.1} parent=1 // pred_fallthru
      _
    // Predicated region
    $region10: #{tpu_custom_call.1} parent=1 // pred_check
      _
    $region11: #{tpu_custom_call.1} parent=1 // pred_check_branch
      %18 = sbr.rel (0) target = $region13
    $region12: #{tpu_custom_call.1} parent=1 // pred_region
      _
    $region13: #{tpu_custom_call.1} parent=1 // pred_fallthru
      _
    // Predicated region
    $region14: #{tpu_custom_call.1} parent=1 // pred_check
      _
    $region15: #{tpu_custom_call.1} parent=1 // pred_check_branch
      %20 = sbr.rel (0) target = $region17
    $region16: #{tpu_custom_call.1} parent=1 // pred_region
      _
    $region17: #{tpu_custom_call.1} parent=1 // pred_fallthru
      _
    // Predicated region
    $region18: #{tpu_custom_call.1} parent=1 // pred_check
      _
    $region19: #{tpu_custom_call.1} parent=1 // pred_check_branch
      %22 = sbr.rel (0) target = $region21
    $region20: #{tpu_custom_call.1} parent=1 // pred_region
      _
    $region21: #{tpu_custom_call.1} parent=1 // pred_fallthru
      _
    // Predicated region
    $region22: #{tpu_custom_call.1} parent=1 // pred_check
      _
    $region23: #{tpu_custom_call.1} parent=1 // pred_check_branch
      %24 = sbr.rel (0) target = $region25
    $region24: #{tpu_custom_call.1} parent=1 // pred_region
      _
    $region25: #{tpu_custom_call.1} parent=1 // pred_fallthru
      _
    // Predicated region
    $region26: #{tpu_custom_call.1} parent=1 // pred_check
      _
    $region27: #{tpu_custom_call.1} parent=1 // pred_check_branch
      %26 = sbr.rel (0) target = $region29
    $region28: #{tpu_custom_call.1} parent=1 // pred_region
      _
    $region29: #{tpu_custom_call.1} parent=1 // pred_fallthru
      _
    %v27 = vld [vmem:[%s0] sm:$0xff]
    %v28 = vld [vmem:[%s0 + $0x8] sm:$0xff]
    %v29 = vld [vmem:[%s1] sm:$0xff]
    %v30 = vld [vmem:[%s1 + $0x8] sm:$0xff]
    %v31 = vld [vmem:[%s1 + $0x10] sm:$0xff]
    %v32 = vld [vmem:[%s1 + $0x18] sm:$0xff]
    %v33 = vld [vmem:[%s2] sm:$0x1]
    %v35 = vperm.slane %v33, 0
    %vm37 = vcmask 261120
    %v39 = vsel %vm37, %v27, 0
    %v42 = vsel %vm37, %v28, 0
    %44 = vmatpush.msra.mxu0 0.0
    %45 = vmatpush.msra.mxu0 0.0
    %46 = vmatpush.msra.mxu0 0.0
    %47 = vmatpush.msra.mxu0 0.0
    %48 = vmatpush.msra.mxu0 0.0
    %49 = vmatpush.msra.mxu0 0.0
    %50 = vmatpush.msra.mxu0 0.0
    %51 = vmatpush.msra.mxu0 0.0
    %52 = vmatpush.msra.mxu0 0.0
    %53 = vmatpush.msra.mxu0 0.0
    %54 = vmatpush.msra.mxu0 0.0
    %55 = vmatpush.msra.mxu0 0.0
    %v56 = vand.u32 %v32, 4294901760
    %57 = vmatpush.msra.mxu0 %v56
    %v58 = vand.u32 %v31, 4294901760
    %59 = vmatpush.msra.mxu0 %v58
    %v60 = vand.u32 %v30, 4294901760
    %61 = vmatpush.msra.mxu0 %v60
    %v62 = vand.u32 %v29, 4294901760
    %63 = vmatpush.msra.mxu0 %v62
    %v64 = vand.u32 %v39, 4294901760
    %v65 = vsub.f32 %v39, %v64
    %v66 = vand.u32 %v65, 4294901760
    %v67 = vsub.f32 %v65, %v66
    %v68 = vand.u32 %v67, 4294901760
    %69 = vmatmul.f32.gmra.mxu0 %v68
    %v70 = vpop.f32.mrf.mxu0
    %v71 = vadd.f32 %v35, %v70
    %v72 = vand.u32 %v42, 4294901760
    %v73 = vsub.f32 %v42, %v72
    %v74 = vand.u32 %v73, 4294901760
    %v75 = vsub.f32 %v73, %v74
    %v76 = vand.u32 %v75, 4294901760
    %77 = vmatmul.f32.gmra.mxu0 %v76
    %v78 = vpop.f32.mrf.mxu0
    %v79 = vadd.f32 %v35, %v78
    %80 = vdwg.mxu0
    %81 = vmatpush.msra.mxu0 0.0
    %82 = vmatpush.msra.mxu0 0.0
    %83 = vmatpush.msra.mxu0 0.0
    %84 = vmatpush.msra.mxu0 0.0
    %85 = vmatpush.msra.mxu0 0.0
    %86 = vmatpush.msra.mxu0 0.0
    %87 = vmatpush.msra.mxu0 0.0
    %88 = vmatpush.msra.mxu0 0.0
    %89 = vmatpush.msra.mxu0 0.0
    %90 = vmatpush.msra.mxu0 0.0
    %91 = vmatpush.msra.mxu0 0.0
    %92 = vmatpush.msra.mxu0 0.0
    %v93 = vand.u32 %v32, 4294901760
    %v94 = vsub.f32 %v32, %v93
    %v95 = vand.u32 %v94, 4294901760
    %v96 = vsub.f32 %v94, %v95
    %v97 = vand.u32 %v96, 4294901760
    %98 = vmatpush.msra.mxu0 %v97
    %v99 = vand.u32 %v31, 4294901760
    %v100 = vsub.f32 %v31, %v99
    %v101 = vand.u32 %v100, 4294901760
    %v102 = vsub.f32 %v100, %v101
    %v103 = vand.u32 %v102, 4294901760
    %104 = vmatpush.msra.mxu0 %v103
    %v105 = vand.u32 %v30, 4294901760
    %v106 = vsub.f32 %v30, %v105
    %v107 = vand.u32 %v106, 4294901760
    %v108 = vsub.f32 %v106, %v107
    %v109 = vand.u32 %v108, 4294901760
    %110 = vmatpush.msra.mxu0 %v109
    %v111 = vand.u32 %v29, 4294901760
    %v112 = vsub.f32 %v29, %v111
    %v113 = vand.u32 %v112, 4294901760
    %v114 = vsub.f32 %v112, %v113
    %v115 = vand.u32 %v114, 4294901760
    %116 = vmatpush.msra.mxu0 %v115
    %v117 = vand.u32 %v39, 4294901760
    %118 = vmatmul.f32.gmra.mxu0 %v117
    %v119 = vpop.f32.mrf.mxu0
    %v120 = vadd.f32 %v71, %v119
    %v121 = vand.u32 %v42, 4294901760
    %122 = vmatmul.f32.gmra.mxu0 %v121
    %v123 = vpop.f32.mrf.mxu0
    %v124 = vadd.f32 %v79, %v123
    %125 = vdwg.mxu0
    %126 = vmatpush.msra.mxu0 0.0
    %127 = vmatpush.msra.mxu0 0.0
    %128 = vmatpush.msra.mxu0 0.0
    %129 = vmatpush.msra.mxu0 0.0
    %130 = vmatpush.msra.mxu0 0.0
    %131 = vmatpush.msra.mxu0 0.0
    %132 = vmatpush.msra.mxu0 0.0
    %133 = vmatpush.msra.mxu0 0.0
    %134 = vmatpush.msra.mxu0 0.0
    %135 = vmatpush.msra.mxu0 0.0
    %136 = vmatpush.msra.mxu0 0.0
    %137 = vmatpush.msra.mxu0 0.0
    %v138 = vand.u32 %v32, 4294901760
    %v139 = vsub.f32 %v32, %v138
    %140 = vmatpush.msra.mxu0 %v139
    %v141 = vand.u32 %v31, 4294901760
    %v142 = vsub.f32 %v31, %v141
    %143 = vmatpush.msra.mxu0 %v142
    %v144 = vand.u32 %v30, 4294901760
    %v145 = vsub.f32 %v30, %v144
    %146 = vmatpush.msra.mxu0 %v145
    %v147 = vand.u32 %v29, 4294901760
    %v148 = vsub.f32 %v29, %v147
    %149 = vmatpush.msra.mxu0 %v148
    %v150 = vand.u32 %v39, 4294901760
    %v151 = vsub.f32 %v39, %v150
    %152 = vmatmul.f32.gmra.mxu0 %v151
    %v153 = vpop.f32.mrf.mxu0
    %v154 = vadd.f32 %v120, %v153
    %v155 = vand.u32 %v42, 4294901760
    %v156 = vsub.f32 %v42, %v155
    %157 = vmatmul.f32.gmra.mxu0 %v156
    %v158 = vpop.f32.mrf.mxu0
    %v159 = vadd.f32 %v124, %v158
    %160 = vdwg.mxu0
    %161 = vmatpush.msra.mxu0 0.0
    %162 = vmatpush.msra.mxu0 0.0
    %163 = vmatpush.msra.mxu0 0.0
    %164 = vmatpush.msra.mxu0 0.0
    %165 = vmatpush.msra.mxu0 0.0
    %166 = vmatpush.msra.mxu0 0.0
    %167 = vmatpush.msra.mxu0 0.0
    %168 = vmatpush.msra.mxu0 0.0
    %169 = vmatpush.msra.mxu0 0.0
    %170 = vmatpush.msra.mxu0 0.0
    %171 = vmatpush.msra.mxu0 0.0
    %172 = vmatpush.msra.mxu0 0.0
    %v173 = vand.u32 %v32, 4294901760
    %174 = vmatpush.msra.mxu0 %v173
    %v175 = vand.u32 %v31, 4294901760
    %176 = vmatpush.msra.mxu0 %v175
    %v177 = vand.u32 %v30, 4294901760
    %178 = vmatpush.msra.mxu0 %v177
    %v179 = vand.u32 %v29, 4294901760
    %180 = vmatpush.msra.mxu0 %v179
    %v181 = vand.u32 %v39, 4294901760
    %v182 = vsub.f32 %v39, %v181
    %v183 = vand.u32 %v182, 4294901760
    %184 = vmatmul.f32.gmra.mxu0 %v183
    %v185 = vpop.f32.mrf.mxu0
    %v186 = vadd.f32 %v154, %v185
    %v187 = vand.u32 %v42, 4294901760
    %v188 = vsub.f32 %v42, %v187
    %v189 = vand.u32 %v188, 4294901760
    %190 = vmatmul.f32.gmra.mxu0 %v189
    %v191 = vpop.f32.mrf.mxu0
    %v192 = vadd.f32 %v159, %v191
    %193 = vdwg.mxu0
    %194 = vmatpush.msra.mxu0 0.0
    %195 = vmatpush.msra.mxu0 0.0
    %196 = vmatpush.msra.mxu0 0.0
    %197 = vmatpush.msra.mxu0 0.0
    %198 = vmatpush.msra.mxu0 0.0
    %199 = vmatpush.msra.mxu0 0.0
    %200 = vmatpush.msra.mxu0 0.0
    %201 = vmatpush.msra.mxu0 0.0
    %202 = vmatpush.msra.mxu0 0.0
    %203 = vmatpush.msra.mxu0 0.0
    %204 = vmatpush.msra.mxu0 0.0
    %205 = vmatpush.msra.mxu0 0.0
    %v206 = vand.u32 %v32, 4294901760
    %v207 = vsub.f32 %v32, %v206
    %v208 = vand.u32 %v207, 4294901760
    %209 = vmatpush.msra.mxu0 %v208
    %v210 = vand.u32 %v31, 4294901760
    %v211 = vsub.f32 %v31, %v210
    %v212 = vand.u32 %v211, 4294901760
    %213 = vmatpush.msra.mxu0 %v212
    %v214 = vand.u32 %v30, 4294901760
    %v215 = vsub.f32 %v30, %v214
    %v216 = vand.u32 %v215, 4294901760
    %217 = vmatpush.msra.mxu0 %v216
    %v218 = vand.u32 %v29, 4294901760
    %v219 = vsub.f32 %v29, %v218
    %v220 = vand.u32 %v219, 4294901760
    %221 = vmatpush.msra.mxu0 %v220
    %v222 = vand.u32 %v39, 4294901760
    %223 = vmatmul.f32.gmra.mxu0 %v222
    %v224 = vpop.f32.mrf.mxu0
    %v225 = vadd.f32 %v186, %v224
    %v226 = vand.u32 %v42, 4294901760
    %227 = vmatmul.f32.gmra.mxu0 %v226
    %v228 = vpop.f32.mrf.mxu0
    %v229 = vadd.f32 %v192, %v228
    %230 = vdwg.mxu0
    %231 = vmatpush.msra.mxu0 0.0
    %232 = vmatpush.msra.mxu0 0.0
    %233 = vmatpush.msra.mxu0 0.0
    %234 = vmatpush.msra.mxu0 0.0
    %235 = vmatpush.msra.mxu0 0.0
    %236 = vmatpush.msra.mxu0 0.0
    %237 = vmatpush.msra.mxu0 0.0
    %238 = vmatpush.msra.mxu0 0.0
    %239 = vmatpush.msra.mxu0 0.0
    %240 = vmatpush.msra.mxu0 0.0
    %241 = vmatpush.msra.mxu0 0.0
    %242 = vmatpush.msra.mxu0 0.0
    %v243 = vand.u32 %v32, 4294901760
    %244 = vmatpush.msra.mxu0 %v243
    %v245 = vand.u32 %v31, 4294901760
    %246 = vmatpush.msra.mxu0 %v245
    %v247 = vand.u32 %v30, 4294901760
    %248 = vmatpush.msra.mxu0 %v247
    %v249 = vand.u32 %v29, 4294901760
    %250 = vmatpush.msra.mxu0 %v249
    %v251 = vand.u32 %v39, 4294901760
    %252 = vmatmul.f32.gmra.mxu0 %v251
    %v253 = vpop.f32.mrf.mxu0
    %v254 = vadd.f32 %v225, %v253
    %v255 = vand.u32 %v42, 4294901760
    %256 = vmatmul.f32.gmra.mxu0 %v255
    %v257 = vpop.f32.mrf.mxu0
    %v258 = vadd.f32 %v229, %v257
    %259 = vdwg.mxu0
    %v260 = vmax.f32 %v254, 0.0
    %v261 = vmax.f32 %v258, 0.0
    %v262 = vld [vmem:[%s3] sm:$0xff]
    %v263 = vld [vmem:[%s3 + $0x8] sm:$0xff]
    %v264 = vld [vmem:[%s3 + $0x10] sm:$0xff]
    %v265 = vld [vmem:[%s3 + $0x18] sm:$0xff]
    %v266 = vld [vmem:[%s3 + $0x20] sm:$0xff]
    %v267 = vld [vmem:[%s3 + $0x28] sm:$0xff]
    %v268 = vld [vmem:[%s3 + $0x30] sm:$0xff]
    %v269 = vld [vmem:[%s3 + $0x38] sm:$0xff]
    %v270 = vld [vmem:[%s4] sm:$0x1]
    %v272 = vperm.slane %v270, 0
    %vm274 = vcmask 523264
    %v276 = vsel %vm274, %v260, 0
    %v279 = vsel %vm274, %v261, 0
    %281 = vmatpush.msra.mxu0 0.0
    %282 = vmatpush.msra.mxu0 0.0
    %283 = vmatpush.msra.mxu0 0.0
    %284 = vmatpush.msra.mxu0 0.0
    %285 = vmatpush.msra.mxu0 0.0
    %286 = vmatpush.msra.mxu0 0.0
    %287 = vmatpush.msra.mxu0 0.0
    %288 = vmatpush.msra.mxu0 0.0
    %v289 = vand.u32 %v269, 4294901760
    %290 = vmatpush.msra.mxu0 %v289
    %v291 = vand.u32 %v268, 4294901760
    %292 = vmatpush.msra.mxu0 %v291
    %v293 = vand.u32 %v267, 4294901760
    %294 = vmatpush.msra.mxu0 %v293
    %v295 = vand.u32 %v266, 4294901760
    %296 = vmatpush.msra.mxu0 %v295
    %v297 = vand.u32 %v265, 4294901760
    %298 = vmatpush.msra.mxu0 %v297
    %v299 = vand.u32 %v264, 4294901760
    %300 = vmatpush.msra.mxu0 %v299
    %v301 = vand.u32 %v263, 4294901760
    %302 = vmatpush.msra.mxu0 %v301
    %v303 = vand.u32 %v262, 4294901760
    %304 = vmatpush.msra.mxu0 %v303
    %v305 = vand.u32 %v276, 4294901760
    %v306 = vsub.f32 %v276, %v305
    %v307 = vand.u32 %v306, 4294901760
    %v308 = vsub.f32 %v306, %v307
    %v309 = vand.u32 %v308, 4294901760
    %310 = vmatmul.f32.gmra.mxu0 %v309
    %v311 = vpop.f32.mrf.mxu0
    %v312 = vadd.f32 %v272, %v311
    %v313 = vand.u32 %v279, 4294901760
    %v314 = vsub.f32 %v279, %v313
    %v315 = vand.u32 %v314, 4294901760
    %v316 = vsub.f32 %v314, %v315
    %v317 = vand.u32 %v316, 4294901760
    %318 = vmatmul.f32.gmra.mxu0 %v317
    %v319 = vpop.f32.mrf.mxu0
    %v320 = vadd.f32 %v272, %v319
    %321 = vdwg.mxu0
    %322 = vmatpush.msra.mxu0 0.0
    %323 = vmatpush.msra.mxu0 0.0
    %324 = vmatpush.msra.mxu0 0.0
    %325 = vmatpush.msra.mxu0 0.0
    %326 = vmatpush.msra.mxu0 0.0
    %327 = vmatpush.msra.mxu0 0.0
    %328 = vmatpush.msra.mxu0 0.0
    %329 = vmatpush.msra.mxu0 0.0
    %v330 = vand.u32 %v269, 4294901760
    %v331 = vsub.f32 %v269, %v330
    %v332 = vand.u32 %v331, 4294901760
    %v333 = vsub.f32 %v331, %v332
    %v334 = vand.u32 %v333, 4294901760
    %335 = vmatpush.msra.mxu0 %v334
    %v336 = vand.u32 %v268, 4294901760
    %v337 = vsub.f32 %v268, %v336
    %v338 = vand.u32 %v337, 4294901760
    %v339 = vsub.f32 %v337, %v338
    %v340 = vand.u32 %v339, 4294901760
    %341 = vmatpush.msra.mxu0 %v340
    %v342 = vand.u32 %v267, 4294901760
    %v343 = vsub.f32 %v267, %v342
    %v344 = vand.u32 %v343, 4294901760
    %v345 = vsub.f32 %v343, %v344
    %v346 = vand.u32 %v345, 4294901760
    %347 = vmatpush.msra.mxu0 %v346
    %v348 = vand.u32 %v266, 4294901760
    %v349 = vsub.f32 %v266, %v348
    %v350 = vand.u32 %v349, 4294901760
    %v351 = vsub.f32 %v349, %v350
    %v352 = vand.u32 %v351, 4294901760
    %353 = vmatpush.msra.mxu0 %v352
    %v354 = vand.u32 %v265, 4294901760
    %v355 = vsub.f32 %v265, %v354
    %v356 = vand.u32 %v355, 4294901760
    %v357 = vsub.f32 %v355, %v356
    %v358 = vand.u32 %v357, 4294901760
    %359 = vmatpush.msra.mxu0 %v358
    %v360 = vand.u32 %v264, 4294901760
    %v361 = vsub.f32 %v264, %v360
    %v362 = vand.u32 %v361, 4294901760
    %v363 = vsub.f32 %v361, %v362
    %v364 = vand.u32 %v363, 4294901760
    %365 = vmatpush.msra.mxu0 %v364
    %v366 = vand.u32 %v263, 4294901760
    %v367 = vsub.f32 %v263, %v366
    %v368 = vand.u32 %v367, 4294901760
    %v369 = vsub.f32 %v367, %v368
    %v370 = vand.u32 %v369, 4294901760
    %371 = vmatpush.msra.mxu0 %v370
    %v372 = vand.u32 %v262, 4294901760
    %v373 = vsub.f32 %v262, %v372
    %v374 = vand.u32 %v373, 4294901760
    %v375 = vsub.f32 %v373, %v374
    %v376 = vand.u32 %v375, 4294901760
    %377 = vmatpush.msra.mxu0 %v376
    %v378 = vand.u32 %v276, 4294901760
    %379 = vmatmul.f32.gmra.mxu0 %v378
    %v380 = vpop.f32.mrf.mxu0
    %v381 = vadd.f32 %v312, %v380
    %v382 = vand.u32 %v279, 4294901760
    %383 = vmatmul.f32.gmra.mxu0 %v382
    %v384 = vpop.f32.mrf.mxu0
    %v385 = vadd.f32 %v320, %v384
    %386 = vdwg.mxu0
    %387 = vmatpush.msra.mxu0 0.0
    %388 = vmatpush.msra.mxu0 0.0
    %389 = vmatpush.msra.mxu0 0.0
    %390 = vmatpush.msra.mxu0 0.0
    %391 = vmatpush.msra.mxu0 0.0
    %392 = vmatpush.msra.mxu0 0.0
    %393 = vmatpush.msra.mxu0 0.0
    %394 = vmatpush.msra.mxu0 0.0
    %v395 = vand.u32 %v269, 4294901760
    %v396 = vsub.f32 %v269, %v395
    %397 = vmatpush.msra.mxu0 %v396
    %v398 = vand.u32 %v268, 4294901760
    %v399 = vsub.f32 %v268, %v398
    %400 = vmatpush.msra.mxu0 %v399
    %v401 = vand.u32 %v267, 4294901760
    %v402 = vsub.f32 %v267, %v401
    %403 = vmatpush.msra.mxu0 %v402
    %v404 = vand.u32 %v266, 4294901760
    %v405 = vsub.f32 %v266, %v404
    %406 = vmatpush.msra.mxu0 %v405
    %v407 = vand.u32 %v265, 4294901760
    %v408 = vsub.f32 %v265, %v407
    %409 = vmatpush.msra.mxu0 %v408
    %v410 = vand.u32 %v264, 4294901760
    %v411 = vsub.f32 %v264, %v410
    %412 = vmatpush.msra.mxu0 %v411
    %v413 = vand.u32 %v263, 4294901760
    %v414 = vsub.f32 %v263, %v413
    %415 = vmatpush.msra.mxu0 %v414
    %v416 = vand.u32 %v262, 4294901760
    %v417 = vsub.f32 %v262, %v416
    %418 = vmatpush.msra.mxu0 %v417
    %v419 = vand.u32 %v276, 4294901760
    %v420 = vsub.f32 %v276, %v419
    %421 = vmatmul.f32.gmra.mxu0 %v420
    %v422 = vpop.f32.mrf.mxu0
    %v423 = vadd.f32 %v381, %v422
    %v424 = vand.u32 %v279, 4294901760
    %v425 = vsub.f32 %v279, %v424
    %426 = vmatmul.f32.gmra.mxu0 %v425
    %v427 = vpop.f32.mrf.mxu0
    %v428 = vadd.f32 %v385, %v427
    %429 = vdwg.mxu0
    %430 = vmatpush.msra.mxu0 0.0
    %431 = vmatpush.msra.mxu0 0.0
    %432 = vmatpush.msra.mxu0 0.0
    %433 = vmatpush.msra.mxu0 0.0
    %434 = vmatpush.msra.mxu0 0.0
    %435 = vmatpush.msra.mxu0 0.0
    %436 = vmatpush.msra.mxu0 0.0
    %437 = vmatpush.msra.mxu0 0.0
    %v438 = vand.u32 %v269, 4294901760
    %439 = vmatpush.msra.mxu0 %v438
    %v440 = vand.u32 %v268, 4294901760
    %441 = vmatpush.msra.mxu0 %v440
    %v442 = vand.u32 %v267, 4294901760
    %443 = vmatpush.msra.mxu0 %v442
    %v444 = vand.u32 %v266, 4294901760
    %445 = vmatpush.msra.mxu0 %v444
    %v446 = vand.u32 %v265, 4294901760
    %447 = vmatpush.msra.mxu0 %v446
    %v448 = vand.u32 %v264, 4294901760
    %449 = vmatpush.msra.mxu0 %v448
    %v450 = vand.u32 %v263, 4294901760
    %451 = vmatpush.msra.mxu0 %v450
    %v452 = vand.u32 %v262, 4294901760
    %453 = vmatpush.msra.mxu0 %v452
    %v454 = vand.u32 %v276, 4294901760
    %v455 = vsub.f32 %v276, %v454
    %v456 = vand.u32 %v455, 4294901760
    %457 = vmatmul.f32.gmra.mxu0 %v456
    %v458 = vpop.f32.mrf.mxu0
    %v459 = vadd.f32 %v423, %v458
    %v460 = vand.u32 %v279, 4294901760
    %v461 = vsub.f32 %v279, %v460
    %v462 = vand.u32 %v461, 4294901760
    %463 = vmatmul.f32.gmra.mxu0 %v462
    %v464 = vpop.f32.mrf.mxu0
    %v465 = vadd.f32 %v428, %v464
    %466 = vdwg.mxu0
    %467 = vmatpush.msra.mxu0 0.0
    %468 = vmatpush.msra.mxu0 0.0
    %469 = vmatpush.msra.mxu0 0.0
    %470 = vmatpush.msra.mxu0 0.0
    %471 = vmatpush.msra.mxu0 0.0
    %472 = vmatpush.msra.mxu0 0.0
    %473 = vmatpush.msra.mxu0 0.0
    %474 = vmatpush.msra.mxu0 0.0
    %v475 = vand.u32 %v269, 4294901760
    %v476 = vsub.f32 %v269, %v475
    %v477 = vand.u32 %v476, 4294901760
    %478 = vmatpush.msra.mxu0 %v477
    %v479 = vand.u32 %v268, 4294901760
    %v480 = vsub.f32 %v268, %v479
    %v481 = vand.u32 %v480, 4294901760
    %482 = vmatpush.msra.mxu0 %v481
    %v483 = vand.u32 %v267, 4294901760
    %v484 = vsub.f32 %v267, %v483
    %v485 = vand.u32 %v484, 4294901760
    %486 = vmatpush.msra.mxu0 %v485
    %v487 = vand.u32 %v266, 4294901760
    %v488 = vsub.f32 %v266, %v487
    %v489 = vand.u32 %v488, 4294901760
    %490 = vmatpush.msra.mxu0 %v489
    %v491 = vand.u32 %v265, 4294901760
    %v492 = vsub.f32 %v265, %v491
    %v493 = vand.u32 %v492, 4294901760
    %494 = vmatpush.msra.mxu0 %v493
    %v495 = vand.u32 %v264, 4294901760
    %v496 = vsub.f32 %v264, %v495
    %v497 = vand.u32 %v496, 4294901760
    %498 = vmatpush.msra.mxu0 %v497
    %v499 = vand.u32 %v263, 4294901760
    %v500 = vsub.f32 %v263, %v499
    %v501 = vand.u32 %v500, 4294901760
    %502 = vmatpush.msra.mxu0 %v501
    %v503 = vand.u32 %v262, 4294901760
    %v504 = vsub.f32 %v262, %v503
    %v505 = vand.u32 %v504, 4294901760
    %506 = vmatpush.msra.mxu0 %v505
    %v507 = vand.u32 %v276, 4294901760
    %508 = vmatmul.f32.gmra.mxu0 %v507
    %v509 = vpop.f32.mrf.mxu0
    %v510 = vadd.f32 %v459, %v509
    %v511 = vand.u32 %v279, 4294901760
    %512 = vmatmul.f32.gmra.mxu0 %v511
    %v513 = vpop.f32.mrf.mxu0
    %v514 = vadd.f32 %v465, %v513
    %515 = vdwg.mxu0
    %516 = vmatpush.msra.mxu0 0.0
    %517 = vmatpush.msra.mxu0 0.0
    %518 = vmatpush.msra.mxu0 0.0
    %519 = vmatpush.msra.mxu0 0.0
    %520 = vmatpush.msra.mxu0 0.0
    %521 = vmatpush.msra.mxu0 0.0
    %522 = vmatpush.msra.mxu0 0.0
    %523 = vmatpush.msra.mxu0 0.0
    %v524 = vand.u32 %v269, 4294901760
    %525 = vmatpush.msra.mxu0 %v524
    %v526 = vand.u32 %v268, 4294901760
    %527 = vmatpush.msra.mxu0 %v526
    %v528 = vand.u32 %v267, 4294901760
    %529 = vmatpush.msra.mxu0 %v528
    %v530 = vand.u32 %v266, 4294901760
    %531 = vmatpush.msra.mxu0 %v530
    %v532 = vand.u32 %v265, 4294901760
    %533 = vmatpush.msra.mxu0 %v532
    %v534 = vand.u32 %v264, 4294901760
    %535 = vmatpush.msra.mxu0 %v534
    %v536 = vand.u32 %v263, 4294901760
    %537 = vmatpush.msra.mxu0 %v536
    %v538 = vand.u32 %v262, 4294901760
    %539 = vmatpush.msra.mxu0 %v538
    %v540 = vand.u32 %v276, 4294901760
    %541 = vmatmul.f32.gmra.mxu0 %v540
    %v542 = vpop.f32.mrf.mxu0
    %v543 = vadd.f32 %v510, %v542
    %v544 = vand.u32 %v279, 4294901760
    %545 = vmatmul.f32.gmra.mxu0 %v544
    %v546 = vpop.f32.mrf.mxu0
    %v547 = vadd.f32 %v514, %v546
    %548 = vdwg.mxu0
    %v549 = vadd.f32 %v543, %v27
    %v550 = vadd.f32 %v547, %v28
    %v551 = vsel %vm37, %v549, 0.0
    %552 = vadd.xlane.f32.xlu0 %v551
    %v553 = vpop.xlane.xlu0 %552
    %v554 = vsel %vm37, %v550, 0.0
    %555 = vadd.xlane.f32.xlu0 %v554
    %v556 = vpop.xlane.xlu0 %555
    %v557 = vrcp.pop 32.0
    %v558 = vmul.f32 32.0, %v557
    %v559 = vsub.f32 1.0, %v558
    %v560 = vmul.f32 %v557, %v559
    %v561 = vadd.f32 %v557, %v560
    %vm562 = vweird.f32 %v557
    %v563 = vsel %vm562, %v557, %v561
    %v564 = vmul.f32 %v553, %v563
    %v565 = vmul.f32 %v556, %v563
    %v566 = vsub.f32 %v549, %v564
    %v567 = vsub.f32 %v550, %v565
    %v568 = vmul.f32 %v566, %v566
    %v569 = vmul.f32 %v567, %v567
    %v570 = vsel %vm37, %v568, 0.0
    %571 = vadd.xlane.f32.xlu0 %v570
    %v572 = vpop.xlane.xlu0 %571
    %v573 = vsel %vm37, %v569, 0.0
    %574 = vadd.xlane.f32.xlu0 %v573
    %v575 = vpop.xlane.xlu0 %574
    %v576 = vmul.f32 %v572, %v563
    %v577 = vmul.f32 %v575, %v563
    %v578 = vadd.f32 %v576, 1e-05
    %v579 = vadd.f32 %v577, 1e-05
    %v580 = vrsqrt.pop %v578
    %v581 = vmul.f32 %v580, %v578
    %v582 = vmul.f32 %v581, %v580
    %v583 = vmul.f32 0.5, %v582
    %v584 = vsub.f32 1.5, %v583
    %v585 = vmul.f32 %v580, %v584
    %vm586 = vweird.f32 %v578
    %vm587 = vweird.f32 %v580
    %vm588 = vmor %vm586, %vm587
    %v589 = vsel %vm588, %v580, %v585
    %v590 = vrsqrt.pop %v579
    %v591 = vmul.f32 %v590, %v579
    %v592 = vmul.f32 %v591, %v590
    %v593 = vmul.f32 0.5, %v592
    %v594 = vsub.f32 1.5, %v593
    %v595 = vmul.f32 %v590, %v594
    %vm596 = vweird.f32 %v579
    %vm597 = vweird.f32 %v590
    %vm598 = vmor %vm596, %vm597
    %v599 = vsel %vm598, %v590, %v595
    %v600 = vmul.f32 %v566, %v589
    %v601 = vmul.f32 %v567, %v599
    %v602 = vld [vmem:[%s5] sm:$0x1]
    %v604 = vperm.slane %v602, 0
    %v606 = vmul.f32 %v600, %v604
    %v607 = vmul.f32 %v601, %v604
    %v608 = vld [vmem:[%s6] sm:$0x1]
    %v610 = vperm.slane %v608, 0
    %v612 = vadd.f32 %v606, %v610
    %v613 = vadd.f32 %v607, %v610
    %614 = vst.msk [vmem:[#allocation2] sm:$0xff] %vm37, %v612
    %615 = vst.msk [vmem:[#allocation2 + $0x8] sm:$0xff] %vm37, %v613
    // Predicated region
    $region30: #{tpu_custom_call.1} parent=1 // pred_check
      _
    $region31: #{tpu_custom_call.1} parent=1 // pred_check_branch
      %617 = sbr.rel (0) target = $region33
    $region32: #{tpu_custom_call.1} parent=1 // pred_region
      %619 = vsyncadd [#allocation3], 0
      %s620 = sshll.u32 [#allocation2], 4
      %s621 = int_to_ptr.vmem [resolvable:$true] %s620
      %s622 = sshll.u32 %s7, 4
      %s623 = int_to_ptr.hbm [resolvable:$true] %s622
      %628 = dma.vmem_to_hbm [thread:$0]  %s621, 256, %s623, [#allocation3], 128, 128, 8
    $region33: #{tpu_custom_call.1} parent=1 // pred_fallthru
      _
    // Predicated region
    $region34: #{tpu_custom_call.1} parent=1 // pred_check
      _
    $region35: #{tpu_custom_call.1} parent=1 // pred_check_branch
      %630 = sbr.rel (0) target = $region37
    $region36: #{tpu_custom_call.1} parent=1 // pred_region
      %632 = dma.done [#allocation3], 256
    $region37: #{tpu_custom_call.1} parent=1 // pred_fallthru
      _
    %633 = vsyncpa [#allocation3], 1

</llo_original>
